<compile_context>
chip_gen: v7x
topology: tpu7x:2x2x1
jax: 0.10.0
libtpu: 0.0.40
codegen_flags: <defaults>
</compile_context>

<pallas_src>
import functools

import jax
import jax.numpy as jnp
from jax.experimental import pallas as pl
from jax.experimental.pallas import tpu as pltpu

LANE = 128      # vreg lane width
SUBLANE = 8     # f32 sublane count


def _round_up(v, m):
    return (v + m - 1) // m * m


def _pad2(a, rows, cols):
    return jnp.pad(a, ((0, rows - a.shape[0]), (0, cols - a.shape[1])))


def mlp_kernel(x_ref, w1_ref, b1_ref, w2_ref, b2_ref, w3_ref, b3_ref,
               w4_ref, b4_ref, o_ref):
    # Layer 1: Linear + Tanh  (MXU dot, f32 accumulation; tanh goes to the EUP slot)
    w1 = w1_ref[...]
    h = jnp.dot(x_ref[...], w1, preferred_element_type=jnp.float32)
    h = jnp.tanh(h + b1_ref[...])
    # Layer 2: Linear + ReLU
    w2 = w2_ref[...]
    h = jnp.dot(h.astype(w2.dtype), w2, preferred_element_type=jnp.float32)
    h = jnp.maximum(h + b2_ref[...], 0.0)
    # Layer 3: Linear + ReLU
    w3 = w3_ref[...]
    h = jnp.dot(h.astype(w3.dtype), w3, preferred_element_type=jnp.float32)
    h = jnp.maximum(h + b3_ref[...], 0.0)
    # Layer 4: Linear (logits)
    w4 = w4_ref[...]
    h = jnp.dot(h.astype(w4.dtype), w4, preferred_element_type=jnp.float32)
    o_ref[...] = (h + b4_ref[...]).astype(o_ref.dtype)


@functools.partial(jax.jit, static_argnames=("block_batch", "use_bf16"))
def neural_network_forward(x, params, *, block_batch=512, use_bf16=False):
    """params: (w1, b1, w2, b2, w3, b3, w4, b4); w* are (in, out), b* are (1, out)."""
    w1, b1, w2, b2, w3, b3, w4, b4 = params
    batch, in_dim = x.shape
    d1, d2, d3 = w1.shape[1], w2.shape[1], w3.shape[1]
    out_dim = w4.shape[1]
    out_dtype = x.dtype

    # Lane-dense padding of every feature dim to a multiple of 128.
    in_p = _round_up(in_dim, LANE)
    d1_p = _round_up(d1, LANE)
    d2_p = _round_up(d2, LANE)
    d3_p = _round_up(d3, LANE)
    out_p = _round_up(out_dim, LANE)

    # Batch tile: large when the batch is large, never bigger than the padded batch.
    tb = min(_round_up(block_batch, SUBLANE), _round_up(batch, SUBLANE))
    batch_p = _round_up(batch, tb)

    xp = _pad2(x, batch_p, in_p)
    w1p, b1p = _pad2(w1, in_p, d1_p), _pad2(b1, 1, d1_p)
    w2p, b2p = _pad2(w2, d1_p, d2_p), _pad2(b2, 1, d2_p)
    w3p, b3p = _pad2(w3, d2_p, d3_p), _pad2(b3, 1, d3_p)
    w4p, b4p = _pad2(w4, d3_p, out_p), _pad2(b4, 1, out_p)

    if use_bf16:
        # bf16 matmul operands: ~2x MXU throughput + half the x/weight DMA bytes on
        # v6e/v7x; accumulation stays f32 (preferred_element_type), biases stay f32.
        xp = xp.astype(jnp.bfloat16)
        w1p, w2p, w3p, w4p = (w.astype(jnp.bfloat16)
                              for w in (w1p, w2p, w3p, w4p))

    grid = (batch_p // tb,)

    # Weights/biases: constant index_map -> DMA'd once, VMEM-resident across tiles.
    const = lambda a: pl.BlockSpec(a.shape, lambda i: (0, 0))

    flops = 2 * batch * (in_dim * d1 + d1 * d2 + d2 * d3 + d3 * out_dim)
    bytes_accessed = (
        xp.size * xp.dtype.itemsize
        + sum(a.size * a.dtype.itemsize
              for a in (w1p, b1p, w2p, b2p, w3p, b3p, w4p, b4p))
        + batch_p * out_p * jnp.dtype(out_dtype).itemsize)

    out_padded = pl.pallas_call(
        mlp_kernel,
        out_shape=jax.ShapeDtypeStruct((batch_p, out_p), out_dtype),
        grid=grid,
        in_specs=[
            pl.BlockSpec((tb, in_p), lambda i: (i, 0)),   # batch-tiled input
            const(w1p), const(b1p), const(w2p), const(b2p),
            const(w3p), const(b3p), const(w4p), const(b4p),
        ],
        out_specs=pl.BlockSpec((tb, out_p), lambda i: (i, 0)),
        compiler_params=pltpu.CompilerParams(
            dimension_semantics=("parallel",)),
        cost_estimate=pl.CostEstimate(
            flops=flops,
            transcendentals=batch * d1,          # tanh on the first hidden layer
            bytes_accessed=bytes_accessed),
    )(xp, w1p, b1p, w2p, b2p, w3p, b3p, w4p, b4p)

    return out_padded[:batch, :out_dim]


def init_linear(key, fan_in, fan_out, dtype=jnp.float32):
    """PyTorch-style default init: U(-1/sqrt(fan_in), 1/sqrt(fan_in))."""
    k_w, k_b = jax.random.split(key)
    bound = 1.0 / (fan_in ** 0.5)
    # Stored as (fan_in, fan_out) == W.T relative to torch's (out, in).
    w = jax.random.uniform(k_w, (fan_in, fan_out), dtype, minval=-bound, maxval=bound)
    b = jax.random.uniform(k_b, (1, fan_out), dtype, minval=-bound, maxval=bound)
    return w, b


if __name__ == "__main__":
    # Module dims: NeuralNetwork(input=32, output=16, d1=64, d2=64, d3=32)
    input_dim, output_dim, d1, d2, d3 = 32, 16, 64, 64, 32
    batch = 64

    key = jax.random.PRNGKey(0)
    k_x, k1, k2, k3, k4 = jax.random.split(key, 5)

    x = jax.random.normal(k_x, (batch, input_dim), jnp.float32)

    w1, b1 = init_linear(k1, input_dim, d1)
    w2, b2 = init_linear(k2, d1, d2)
    w3, b3 = init_linear(k3, d2, d3)
    w4, b4 = init_linear(k4, d3, output_dim)
    params = (w1, b1, w2, b2, w3, b3, w4, b4)

    # block_batch=32 -> 2 batch tiles: exercises the pipelined batch grid even at
    # this small test size (production default is block_batch=512).
    logits = neural_network_forward(x, params, block_batch=32, use_bf16=False)
    logits = jax.block_until_ready(logits)

    # Reference check in plain JAX (same math as the PyTorch module).
    h = jnp.tanh(x @ w1 + b1)
    h = jnp.maximum(h @ w2 + b2, 0.0)
    h = jnp.maximum(h @ w3 + b3, 0.0)
    ref = h @ w4 + b4
    assert logits.shape == (batch, output_dim)
    assert jnp.allclose(logits, ref, atol=1e-5, rtol=1e-5)

    # Single-tile path (whole batch in one grid step) must also match exactly.
    logits_one_tile = jax.block_until_ready(
        neural_network_forward(x, params, block_batch=512, use_bf16=False))
    assert jnp.allclose(logits_one_tile, ref, atol=1e-5, rtol=1e-5)

    # bf16 matmul-operand fast path (v6e/v7x); looser tolerance since x/W are bf16.
    logits_bf16 = jax.block_until_ready(
        neural_network_forward(x, params, block_batch=32, use_bf16=True))
    assert logits_bf16.shape == (batch, output_dim)
    assert jnp.allclose(logits_bf16, ref, atol=5e-2, rtol=5e-2)

    print("KERNEL_OK")
</pallas_src>

<mosaic_0001>
module attributes {stable_mosaic.version = 11 : i64} {
  func.func @mlp_kernel(%arg0: i32, %arg1: memref<32x128xf32, #tpu.memory_space<vmem>>, %arg2: memref<128x128xf32, #tpu.memory_space<vmem>>, %arg3: memref<1x128xf32, #tpu.memory_space<vmem>>, %arg4: memref<128x128xf32, #tpu.memory_space<vmem>>, %arg5: memref<1x128xf32, #tpu.memory_space<vmem>>, %arg6: memref<128x128xf32, #tpu.memory_space<vmem>>, %arg7: memref<1x128xf32, #tpu.memory_space<vmem>>, %arg8: memref<128x128xf32, #tpu.memory_space<vmem>>, %arg9: memref<1x128xf32, #tpu.memory_space<vmem>>, %arg10: memref<32x128xf32, #tpu.memory_space<vmem>>) attributes {dimension_semantics = [#tpu.dimension_semantics<parallel>], iteration_bounds = array<i64: 2>, scalar_prefetch = 0 : i64, scratch_operands = 0 : i64, tpu.core_type = #tpu.core_type<tc>, window_params = [{transform_indices = @transform_0, window_bounds = array<i64: 32, 128>}, {pipeline_mode = #tpu.pipeline_mode<synchronous>, transform_indices = @transform_1, window_bounds = array<i64: 128, 128>}, {pipeline_mode = #tpu.pipeline_mode<synchronous>, transform_indices = @transform_2, window_bounds = array<i64: 1, 128>}, {pipeline_mode = #tpu.pipeline_mode<synchronous>, transform_indices = @transform_3, window_bounds = array<i64: 128, 128>}, {pipeline_mode = #tpu.pipeline_mode<synchronous>, transform_indices = @transform_4, window_bounds = array<i64: 1, 128>}, {pipeline_mode = #tpu.pipeline_mode<synchronous>, transform_indices = @transform_5, window_bounds = array<i64: 128, 128>}, {pipeline_mode = #tpu.pipeline_mode<synchronous>, transform_indices = @transform_6, window_bounds = array<i64: 1, 128>}, {pipeline_mode = #tpu.pipeline_mode<synchronous>, transform_indices = @transform_7, window_bounds = array<i64: 128, 128>}, {pipeline_mode = #tpu.pipeline_mode<synchronous>, transform_indices = @transform_8, window_bounds = array<i64: 1, 128>}, {transform_indices = @transform_9, window_bounds = array<i64: 32, 128>}]} {
    %c0 = arith.constant 0 : index
    %c0_0 = arith.constant 0 : index
    %0 = vector.load %arg2[%c0, %c0_0] : memref<128x128xf32, #tpu.memory_space<vmem>>, vector<128x128xf32>
    %c0_1 = arith.constant 0 : index
    %c0_2 = arith.constant 0 : index
    %1 = vector.load %arg1[%c0_1, %c0_2] : memref<32x128xf32, #tpu.memory_space<vmem>>, vector<32x128xf32>
    %cst = arith.constant dense<0.000000e+00> : vector<32x128xf32>
    %2 = tpu.matmul %1, %0, %cst {dimension_numbers = #tpu.dot_dimension_numbers<[1], [0], [0], [1], [0, 0, 1, 1], [], []>} : vector<32x128xf32>, vector<128x128xf32>, vector<32x128xf32> -> vector<32x128xf32>
    %c0_3 = arith.constant 0 : index
    %c0_4 = arith.constant 0 : index
    %3 = vector.load %arg3[%c0_3, %c0_4] : memref<1x128xf32, #tpu.memory_space<vmem>>, vector<1x128xf32>
    %4 = vector.broadcast %3 : vector<1x128xf32> to vector<32x128xf32>
    %5 = arith.addf %2, %4 : vector<32x128xf32>
    %6 = math.tanh %5 : vector<32x128xf32>
    %c0_5 = arith.constant 0 : index
    %c0_6 = arith.constant 0 : index
    %7 = vector.load %arg4[%c0_5, %c0_6] : memref<128x128xf32, #tpu.memory_space<vmem>>, vector<128x128xf32>
    %cst_7 = arith.constant dense<0.000000e+00> : vector<32x128xf32>
    %8 = tpu.matmul %6, %7, %cst_7 {dimension_numbers = #tpu.dot_dimension_numbers<[1], [0], [0], [1], [0, 0, 1, 1], [], []>} : vector<32x128xf32>, vector<128x128xf32>, vector<32x128xf32> -> vector<32x128xf32>
    %c0_8 = arith.constant 0 : index
    %c0_9 = arith.constant 0 : index
    %9 = vector.load %arg5[%c0_8, %c0_9] : memref<1x128xf32, #tpu.memory_space<vmem>>, vector<1x128xf32>
    %10 = vector.broadcast %9 : vector<1x128xf32> to vector<32x128xf32>
    %11 = arith.addf %8, %10 : vector<32x128xf32>
    %cst_10 = arith.constant 0.000000e+00 : f32
    %12 = vector.broadcast %cst_10 : f32 to vector<32x128xf32>
    %13 = arith.maximumf %11, %12 : vector<32x128xf32>
    %c0_11 = arith.constant 0 : index
    %c0_12 = arith.constant 0 : index
    %14 = vector.load %arg6[%c0_11, %c0_12] : memref<128x128xf32, #tpu.memory_space<vmem>>, vector<128x128xf32>
    %cst_13 = arith.constant dense<0.000000e+00> : vector<32x128xf32>
    %15 = tpu.matmul %13, %14, %cst_13 {dimension_numbers = #tpu.dot_dimension_numbers<[1], [0], [0], [1], [0, 0, 1, 1], [], []>} : vector<32x128xf32>, vector<128x128xf32>, vector<32x128xf32> -> vector<32x128xf32>
    %c0_14 = arith.constant 0 : index
    %c0_15 = arith.constant 0 : index
    %16 = vector.load %arg7[%c0_14, %c0_15] : memref<1x128xf32, #tpu.memory_space<vmem>>, vector<1x128xf32>
    %17 = vector.broadcast %16 : vector<1x128xf32> to vector<32x128xf32>
    %18 = arith.addf %15, %17 : vector<32x128xf32>
    %cst_16 = arith.constant 0.000000e+00 : f32
    %19 = vector.broadcast %cst_16 : f32 to vector<32x128xf32>
    %20 = arith.maximumf %18, %19 : vector<32x128xf32>
    %c0_17 = arith.constant 0 : index
    %c0_18 = arith.constant 0 : index
    %21 = vector.load %arg8[%c0_17, %c0_18] : memref<128x128xf32, #tpu.memory_space<vmem>>, vector<128x128xf32>
    %cst_19 = arith.constant dense<0.000000e+00> : vector<32x128xf32>
    %22 = tpu.matmul %20, %21, %cst_19 {dimension_numbers = #tpu.dot_dimension_numbers<[1], [0], [0], [1], [0, 0, 1, 1], [], []>} : vector<32x128xf32>, vector<128x128xf32>, vector<32x128xf32> -> vector<32x128xf32>
    %c0_20 = arith.constant 0 : index
    %c0_21 = arith.constant 0 : index
    %23 = vector.load %arg9[%c0_20, %c0_21] : memref<1x128xf32, #tpu.memory_space<vmem>>, vector<1x128xf32>
    %24 = vector.broadcast %23 : vector<1x128xf32> to vector<32x128xf32>
    %25 = arith.addf %22, %24 : vector<32x128xf32>
    %c0_22 = arith.constant 0 : index
    %c0_23 = arith.constant 0 : index
    %26 = vector.load %arg10[%c0_22, %c0_23] : memref<32x128xf32, #tpu.memory_space<vmem>>, vector<32x128xf32>
    tpu.vector_store %arg10[%c0_22, %c0_23], %25 {strides = array<i32>} : memref<32x128xf32, #tpu.memory_space<vmem>>, vector<32x128xf32>,
    return
  }
  func.func @transform_0(%arg0: i32) -> (i32, i32) {
    %c0_i32 = arith.constant 0 : i32
    %c0_i32_0 = arith.constant 0 : i32
    return %arg0, %c0_i32 : i32, i32
  }
  func.func @transform_1(%arg0: i32) -> (i32, i32) {
    %c0_i32 = arith.constant 0 : i32
    %c0_i32_0 = arith.constant 0 : i32
    %c0_i32_1 = arith.constant 0 : i32
    return %c0_i32, %c0_i32_0 : i32, i32
  }
  func.func @transform_2(%arg0: i32) -> (i32, i32) {
    %c0_i32 = arith.constant 0 : i32
    %c0_i32_0 = arith.constant 0 : i32
    %c0_i32_1 = arith.constant 0 : i32
    return %c0_i32, %c0_i32_0 : i32, i32
  }
  func.func @transform_3(%arg0: i32) -> (i32, i32) {
    %c0_i32 = arith.constant 0 : i32
    %c0_i32_0 = arith.constant 0 : i32
    %c0_i32_1 = arith.constant 0 : i32
    return %c0_i32, %c0_i32_0 : i32, i32
  }
  func.func @transform_4(%arg0: i32) -> (i32, i32) {
    %c0_i32 = arith.constant 0 : i32
    %c0_i32_0 = arith.constant 0 : i32
    %c0_i32_1 = arith.constant 0 : i32
    return %c0_i32, %c0_i32_0 : i32, i32
  }
  func.func @transform_5(%arg0: i32) -> (i32, i32) {
    %c0_i32 = arith.constant 0 : i32
    %c0_i32_0 = arith.constant 0 : i32
    %c0_i32_1 = arith.constant 0 : i32
    return %c0_i32, %c0_i32_0 : i32, i32
  }
  func.func @transform_6(%arg0: i32) -> (i32, i32) {
    %c0_i32 = arith.constant 0 : i32
    %c0_i32_0 = arith.constant 0 : i32
    %c0_i32_1 = arith.constant 0 : i32
    return %c0_i32, %c0_i32_0 : i32, i32
  }
  func.func @transform_7(%arg0: i32) -> (i32, i32) {
    %c0_i32 = arith.constant 0 : i32
    %c0_i32_0 = arith.constant 0 : i32
    %c0_i32_1 = arith.constant 0 : i32
    return %c0_i32, %c0_i32_0 : i32, i32
  }
  func.func @transform_8(%arg0: i32) -> (i32, i32) {
    %c0_i32 = arith.constant 0 : i32
    %c0_i32_0 = arith.constant 0 : i32
    %c0_i32_1 = arith.constant 0 : i32
    return %c0_i32, %c0_i32_0 : i32, i32
  }
  func.func @transform_9(%arg0: i32) -> (i32, i32) {
    %c0_i32 = arith.constant 0 : i32
    %c0_i32_0 = arith.constant 0 : i32
    return %arg0, %c0_i32 : i32, i32
  }
}

</mosaic_0001>

<llo_original>
// kernel: neural_network_forward.1
$region0: #{neural_network_forward.1}
  #allocation0 [shape = 'u32[]', space=smem, size = 0x4, offset = 0x4, fixed_abs, tag = 'smem constant byte address 0x4 - core index']
  #allocation1 [shape = 'u32[144,128]{1,0:T(1,128)}', space=vmem, size = 0x12000, scoped, tag = 'internal scratch']
  %s0 = inlined_call_operand.vmem [shape: f32[64,128], index: 0, kind: input, shape index: {}]
  %s1 = inlined_call_operand.vmem [shape: f32[128,128], index: 1, kind: input, shape index: {}]
  %s2 = inlined_call_operand.vmem [shape: f32[1,128], index: 2, kind: input, shape index: {}]
  %s3 = inlined_call_operand.vmem [shape: f32[128,128], index: 3, kind: input, shape index: {}]
  %s4 = inlined_call_operand.vmem [shape: f32[1,128], index: 4, kind: input, shape index: {}]
  %s5 = inlined_call_operand.vmem [shape: f32[128,128], index: 5, kind: input, shape index: {}]
  %s6 = inlined_call_operand.vmem [shape: f32[1,128], index: 6, kind: input, shape index: {}]
  %s7 = inlined_call_operand.vmem [shape: f32[128,128], index: 7, kind: input, shape index: {}]
  %s8 = inlined_call_operand.vmem [shape: f32[1,128], index: 8, kind: input, shape index: {}]
  %s9 = inlined_call_operand.vmem [shape: f32[64,128], index: 9, kind: output, shape index: {}]
  %s10 = sld [smem:[#allocation0]]
  $region69: #{neural_network_forward.1} parent=0
    _
  %s12 = ssub.s32 1, %s10
  %s13 = scalar_select 0, %s12, %s10
  loop: start=0, step=1, limit=4
  $region2: #{neural_network_forward.1} parent=0 // loop_pre_header
    _
  $region3: #{neural_network_forward.1} parent=0 // loop_header
    %s15 = sphi 0, %s19
    %p16 = scmp.ge.s32.totalorder %s15, 4
    %s25 = sphi 0, %s27
    %s28 = sphi 0, %s25
    %s29 = sphi 0, %s28
    %s45 = sphi 0, %s29
    %s49 = sphi 0, %s49
    %s51 = sphi 0, %s49
    %s52 = sphi 0, %s51
    %s66 = sphi 0, %s52
    %s70 = sphi 0, %s70
    %s72 = sphi 0, %s70
    %s73 = sphi 0, %s72
    %s87 = sphi 0, %s73
    %s91 = sphi 0, %s91
    %s93 = sphi 0, %s91
    %s94 = sphi 0, %s93
    %s108 = sphi 0, %s94
    %s112 = sphi 0, %s112
    %s114 = sphi 0, %s112
    %s115 = sphi 0, %s114
    %s129 = sphi 0, %s115
    %s133 = sphi 0, %s133
    %s135 = sphi 0, %s133
    %s136 = sphi 0, %s135
    %s150 = sphi 0, %s136
    %s154 = sphi 0, %s154
    %s156 = sphi 0, %s154
    %s157 = sphi 0, %s156
    %s171 = sphi 0, %s157
    %s175 = sphi 0, %s175
    %s177 = sphi 0, %s175
    %s178 = sphi 0, %s177
    %s192 = sphi 0, %s178
    %s196 = sphi 0, %s196
    %s198 = sphi 0, %s196
    %s199 = sphi 0, %s198
    %s213 = sphi 0, %s199
    %s219 = sphi 0, %s221
    %s222 = sphi 0, %s219
    %s223 = sphi 0, %s222
    %s239 = sphi 0, %s223
  $region4: #{neural_network_forward.1} parent=0 // loop_header_branch
    %18 = sbr.rel (%p16) target = $region8
  $region5: #{neural_network_forward.1} parent=0 // loop_body
    %s20 = ssub.s32 %s15, 1
    %s21 = ssub.s32 %s15, 2
    %s22 = sadd.s32 %s15, 1
    %s23 = ssub.s32 %s15, %s22
    %p24 = scmp.eq.s32.totalorder %s23, 0
    %s26 = sadd.s32 %s25, 1
    %s27 = scalar_select %p24, %s25, %s26
    %p30 = pneg %p24
    %p31 = scmp.eq.s32.totalorder %s15, 1
    %p32 = por %p30, %p31
    %p33 = scmp.ne.s32.totalorder %s25, %s28
    %p34 = scmp.eq.s32.totalorder %s15, 0
    %p35 = por %p33, %p34
    %p36 = scmp.ne.s32.totalorder %s25, %s28
    %p37 = scmp.eq.s32.totalorder %s20, 1
    %p38 = por %p36, %p37
    %p39 = scmp.ne.s32.totalorder %s28, %s29
    %p40 = scmp.eq.s32.totalorder %s20, 0
    %p41 = por %p39, %p40
    %p42 = scmp.ne.s32.totalorder %s28, %s29
    %p43 = scmp.eq.s32.totalorder %s21, 1
    %p44 = por %p42, %p43
    %p46 = scmp.ne.s32.totalorder %s29, %s45
    %p47 = scmp.eq.s32.totalorder %s21, 0
    %p48 = por %p46, %p47
    %s50 = sadd.s32 %s49, 1
    %p53 = scmp.eq.s32.totalorder %s15, 1
    %p54 = scmp.ne.s32.totalorder %s49, %s51
    %p55 = scmp.eq.s32.totalorder %s15, 0
    %p56 = por %p54, %p55
    %p57 = scmp.ne.s32.totalorder %s49, %s51
    %p58 = scmp.eq.s32.totalorder %s20, 1
    %p59 = por %p57, %p58
    %p60 = scmp.ne.s32.totalorder %s51, %s52
    %p61 = scmp.eq.s32.totalorder %s20, 0
    %p62 = por %p60, %p61
    %p63 = scmp.ne.s32.totalorder %s51, %s52
    %p64 = scmp.eq.s32.totalorder %s21, 1
    %p65 = por %p63, %p64
    %p67 = scmp.ne.s32.totalorder %s52, %s66
    %p68 = scmp.eq.s32.totalorder %s21, 0
    %p69 = por %p67, %p68
    %s71 = sadd.s32 %s70, 1
    %p74 = scmp.eq.s32.totalorder %s15, 1
    %p75 = scmp.ne.s32.totalorder %s70, %s72
    %p76 = scmp.eq.s32.totalorder %s15, 0
    %p77 = por %p75, %p76
    %p78 = scmp.ne.s32.totalorder %s70, %s72
    %p79 = scmp.eq.s32.totalorder %s20, 1
    %p80 = por %p78, %p79
    %p81 = scmp.ne.s32.totalorder %s72, %s73
    %p82 = scmp.eq.s32.totalorder %s20, 0
    %p83 = por %p81, %p82
    %p84 = scmp.ne.s32.totalorder %s72, %s73
    %p85 = scmp.eq.s32.totalorder %s21, 1
    %p86 = por %p84, %p85
    %p88 = scmp.ne.s32.totalorder %s73, %s87
    %p89 = scmp.eq.s32.totalorder %s21, 0
    %p90 = por %p88, %p89
    %s92 = sadd.s32 %s91, 1
    %p95 = scmp.eq.s32.totalorder %s15, 1
    %p96 = scmp.ne.s32.totalorder %s91, %s93
    %p97 = scmp.eq.s32.totalorder %s15, 0
    %p98 = por %p96, %p97
    %p99 = scmp.ne.s32.totalorder %s91, %s93
    %p100 = scmp.eq.s32.totalorder %s20, 1
    %p101 = por %p99, %p100
    %p102 = scmp.ne.s32.totalorder %s93, %s94
    %p103 = scmp.eq.s32.totalorder %s20, 0
    %p104 = por %p102, %p103
    %p105 = scmp.ne.s32.totalorder %s93, %s94
    %p106 = scmp.eq.s32.totalorder %s21, 1
    %p107 = por %p105, %p106
    %p109 = scmp.ne.s32.totalorder %s94, %s108
    %p110 = scmp.eq.s32.totalorder %s21, 0
    %p111 = por %p109, %p110
    %s113 = sadd.s32 %s112, 1
    %p116 = scmp.eq.s32.totalorder %s15, 1
    %p117 = scmp.ne.s32.totalorder %s112, %s114
    %p118 = scmp.eq.s32.totalorder %s15, 0
    %p119 = por %p117, %p118
    %p120 = scmp.ne.s32.totalorder %s112, %s114
    %p121 = scmp.eq.s32.totalorder %s20, 1
    %p122 = por %p120, %p121
    %p123 = scmp.ne.s32.totalorder %s114, %s115
    %p124 = scmp.eq.s32.totalorder %s20, 0
    %p125 = por %p123, %p124
    %p126 = scmp.ne.s32.totalorder %s114, %s115
    %p127 = scmp.eq.s32.totalorder %s21, 1
    %p128 = por %p126, %p127
    %p130 = scmp.ne.s32.totalorder %s115, %s129
    %p131 = scmp.eq.s32.totalorder %s21, 0
    %p132 = por %p130, %p131
    %s134 = sadd.s32 %s133, 1
    %p137 = scmp.eq.s32.totalorder %s15, 1
    %p138 = scmp.ne.s32.totalorder %s133, %s135
    %p139 = scmp.eq.s32.totalorder %s15, 0
    %p140 = por %p138, %p139
    %p141 = scmp.ne.s32.totalorder %s133, %s135
    %p142 = scmp.eq.s32.totalorder %s20, 1
    %p143 = por %p141, %p142
    %p144 = scmp.ne.s32.totalorder %s135, %s136
    %p145 = scmp.eq.s32.totalorder %s20, 0
    %p146 = por %p144, %p145
    %p147 = scmp.ne.s32.totalorder %s135, %s136
    %p148 = scmp.eq.s32.totalorder %s21, 1
    %p149 = por %p147, %p148
    %p151 = scmp.ne.s32.totalorder %s136, %s150
    %p152 = scmp.eq.s32.totalorder %s21, 0
    %p153 = por %p151, %p152
    %s155 = sadd.s32 %s154, 1
    %p158 = scmp.eq.s32.totalorder %s15, 1
    %p159 = scmp.ne.s32.totalorder %s154, %s156
    %p160 = scmp.eq.s32.totalorder %s15, 0
    %p161 = por %p159, %p160
    %p162 = scmp.ne.s32.totalorder %s154, %s156
    %p163 = scmp.eq.s32.totalorder %s20, 1
    %p164 = por %p162, %p163
    %p165 = scmp.ne.s32.totalorder %s156, %s157
    %p166 = scmp.eq.s32.totalorder %s20, 0
    %p167 = por %p165, %p166
    %p168 = scmp.ne.s32.totalorder %s156, %s157
    %p169 = scmp.eq.s32.totalorder %s21, 1
    %p170 = por %p168, %p169
    %p172 = scmp.ne.s32.totalorder %s157, %s171
    %p173 = scmp.eq.s32.totalorder %s21, 0
    %p174 = por %p172, %p173
    %s176 = sadd.s32 %s175, 1
    %p179 = scmp.eq.s32.totalorder %s15, 1
    %p180 = scmp.ne.s32.totalorder %s175, %s177
    %p181 = scmp.eq.s32.totalorder %s15, 0
    %p182 = por %p180, %p181
    %p183 = scmp.ne.s32.totalorder %s175, %s177
    %p184 = scmp.eq.s32.totalorder %s20, 1
    %p185 = por %p183, %p184
    %p186 = scmp.ne.s32.totalorder %s177, %s178
    %p187 = scmp.eq.s32.totalorder %s20, 0
    %p188 = por %p186, %p187
    %p189 = scmp.ne.s32.totalorder %s177, %s178
    %p190 = scmp.eq.s32.totalorder %s21, 1
    %p191 = por %p189, %p190
    %p193 = scmp.ne.s32.totalorder %s178, %s192
    %p194 = scmp.eq.s32.totalorder %s21, 0
    %p195 = por %p193, %p194
    %s197 = sadd.s32 %s196, 1
    %p200 = scmp.eq.s32.totalorder %s15, 1
    %p201 = scmp.ne.s32.totalorder %s196, %s198
    %p202 = scmp.eq.s32.totalorder %s15, 0
    %p203 = por %p201, %p202
    %p204 = scmp.ne.s32.totalorder %s196, %s198
    %p205 = scmp.eq.s32.totalorder %s20, 1
    %p206 = por %p204, %p205
    %p207 = scmp.ne.s32.totalorder %s198, %s199
    %p208 = scmp.eq.s32.totalorder %s20, 0
    %p209 = por %p207, %p208
    %p210 = scmp.ne.s32.totalorder %s198, %s199
    %p211 = scmp.eq.s32.totalorder %s21, 1
    %p212 = por %p210, %p211
    %p214 = scmp.ne.s32.totalorder %s199, %s213
    %p215 = scmp.eq.s32.totalorder %s21, 0
    %p216 = por %p214, %p215
    %s217 = ssub.s32 %s15, %s22
    %p218 = scmp.eq.s32.totalorder %s217, 0
    %s220 = sadd.s32 %s219, 1
    %s221 = scalar_select %p218, %s219, %s220
    %p224 = pneg %p218
    %p225 = scmp.eq.s32.totalorder %s15, 1
    %p226 = por %p224, %p225
    %p227 = scmp.ne.s32.totalorder %s219, %s222
    %p228 = scmp.eq.s32.totalorder %s15, 0
    %p229 = por %p227, %p228
    %p230 = scmp.ne.s32.totalorder %s219, %s222
    %p231 = scmp.eq.s32.totalorder %s20, 1
    %p232 = por %p230, %p231
    %p233 = scmp.ne.s32.totalorder %s222, %s223
    %p234 = scmp.eq.s32.totalorder %s20, 0
    %p235 = por %p233, %p234
    %p236 = scmp.ne.s32.totalorder %s222, %s223
    %p237 = scmp.eq.s32.totalorder %s21, 1
    %p238 = por %p236, %p237
    %p240 = scmp.ne.s32.totalorder %s223, %s239
    %p241 = scmp.eq.s32.totalorder %s21, 0
    %p242 = por %p240, %p241
    %p243 = scmp.le.s32.totalorder 1, %s15
    %p244 = scmp.lt.s32.totalorder %s15, 3
    %p245 = pnand %p243, %p244
    %p246 = pneg %p245
    // Predicated region
    $region9: #{neural_network_forward.1} parent=5 // pred_check
      _
    $region10: #{neural_network_forward.1} parent=5 // pred_check_branch
      %248 = sbr.rel (%p245) target = $region12
    $region11: #{neural_network_forward.1} parent=5 // pred_region
      %s249 = ssub.s32 %s15, 1
      // Predicated region
      $region13: #{neural_network_forward.1} parent=11 // pred_check
        %p250 = pneg %p62
      $region14: #{neural_network_forward.1} parent=11 // pred_check_branch
        %252 = sbr.rel (%p250) target = $region16
      $region15: #{neural_network_forward.1} parent=11 // pred_region
        _
      $region16: #{neural_network_forward.1} parent=11 // pred_fallthru
        _
      // Predicated region
      $region17: #{neural_network_forward.1} parent=11 // pred_check
        %p253 = pneg %p83
      $region18: #{neural_network_forward.1} parent=11 // pred_check_branch
        %255 = sbr.rel (%p253) target = $region20
      $region19: #{neural_network_forward.1} parent=11 // pred_region
        _
      $region20: #{neural_network_forward.1} parent=11 // pred_fallthru
        _
      // Predicated region
      $region21: #{neural_network_forward.1} parent=11 // pred_check
        %p256 = pneg %p104
      $region22: #{neural_network_forward.1} parent=11 // pred_check_branch
        %258 = sbr.rel (%p256) target = $region24
      $region23: #{neural_network_forward.1} parent=11 // pred_region
        _
      $region24: #{neural_network_forward.1} parent=11 // pred_fallthru
        _
      // Predicated region
      $region25: #{neural_network_forward.1} parent=11 // pred_check
        %p259 = pneg %p125
      $region26: #{neural_network_forward.1} parent=11 // pred_check_branch
        %261 = sbr.rel (%p259) target = $region28
      $region27: #{neural_network_forward.1} parent=11 // pred_region
        _
      $region28: #{neural_network_forward.1} parent=11 // pred_fallthru
        _
      // Predicated region
      $region29: #{neural_network_forward.1} parent=11 // pred_check
        %p262 = pneg %p146
      $region30: #{neural_network_forward.1} parent=11 // pred_check_branch
        %264 = sbr.rel (%p262) target = $region32
      $region31: #{neural_network_forward.1} parent=11 // pred_region
        _
      $region32: #{neural_network_forward.1} parent=11 // pred_fallthru
        _
      // Predicated region
      $region33: #{neural_network_forward.1} parent=11 // pred_check
        %p265 = pneg %p167
      $region34: #{neural_network_forward.1} parent=11 // pred_check_branch
        %267 = sbr.rel (%p265) target = $region36
      $region35: #{neural_network_forward.1} parent=11 // pred_region
        _
      $region36: #{neural_network_forward.1} parent=11 // pred_fallthru
        _
      // Predicated region
      $region37: #{neural_network_forward.1} parent=11 // pred_check
        %p268 = pneg %p188
      $region38: #{neural_network_forward.1} parent=11 // pred_check_branch
        %270 = sbr.rel (%p268) target = $region40
      $region39: #{neural_network_forward.1} parent=11 // pred_region
        _
      $region40: #{neural_network_forward.1} parent=11 // pred_fallthru
        _
      // Predicated region
      $region41: #{neural_network_forward.1} parent=11 // pred_check
        %p271 = pneg %p209
      $region42: #{neural_network_forward.1} parent=11 // pred_check_branch
        %273 = sbr.rel (%p271) target = $region44
      $region43: #{neural_network_forward.1} parent=11 // pred_region
        _
      $region44: #{neural_network_forward.1} parent=11 // pred_fallthru
        _
    $region12: #{neural_network_forward.1} parent=5 // pred_fallthru
      _
    %p274 = scmp.lt.s32.totalorder %s15, 2
    // Predicated region
    $region45: #{neural_network_forward.1} parent=5 // pred_check
      %p275 = pneg %p274
    $region46: #{neural_network_forward.1} parent=5 // pred_check_branch
      %277 = sbr.rel (%p275) target = $region48
    $region47: #{neural_network_forward.1} parent=5 // pred_region
      // Predicated region
      $region49: #{neural_network_forward.1} parent=47 // pred_check
        %p278 = pneg %p35
      $region50: #{neural_network_forward.1} parent=47 // pred_check_branch
        %280 = sbr.rel (%p278) target = $region52
      $region51: #{neural_network_forward.1} parent=47 // pred_region
        %s281 = smul.u32 4, %s15
        %p282 = scmp.lt.s32.totalorder %s281, 7
        %s283 = scalar_select %p282, %s281, 7
        %s284 = smul.addr %s283, 8
        %s285 = scalar_lea.vmem %s0, %s284
        %s286 = smul.u32 4, %s15
      $region52: #{neural_network_forward.1} parent=47 // pred_fallthru
        _
    $region48: #{neural_network_forward.1} parent=5 // pred_fallthru
      _
    %p287 = scmp.le.s32.totalorder 1, %s15
    %p288 = scmp.lt.s32.totalorder %s15, 3
    %p289 = pnand %p287, %p288
    %p290 = pneg %p289
    // Predicated region
    $region53: #{neural_network_forward.1} parent=5 // pred_check
      _
    $region54: #{neural_network_forward.1} parent=5 // pred_check_branch
      %292 = sbr.rel (%p289) target = $region56
    $region55: #{neural_network_forward.1} parent=5 // pred_region
      %s293 = ssub.s32 %s15, 1
      %s294 = smul.u32 4, %s20
      %p295 = scmp.lt.s32.totalorder %s294, 7
      %s296 = scalar_select %p295, %s294, 7
      %s297 = smul.addr %s296, 8
      %s298 = scalar_lea.vmem %s0, %s297
      %p299 = pneg %p41
      %p300 = pneg %p38
      %p301 = pneg %p62
      %p302 = pneg %p59
      %p303 = pneg %p83
      %p304 = pneg %p80
      %p305 = pneg %p104
      %p306 = pneg %p101
      %p307 = pneg %p125
      %p308 = pneg %p122
      %p309 = pneg %p146
      %p310 = pneg %p143
      %p311 = pneg %p167
      %p312 = pneg %p164
      %p313 = pneg %p188
      %p314 = pneg %p185
      %p315 = pneg %p209
      %p316 = pneg %p206
      %p317 = pneg %p235
      %p318 = pneg %p232
      %s319 = smul.u32 4, %s20
      %p320 = scmp.lt.s32.totalorder %s319, 7
      %s321 = scalar_select %p320, %s319, 7
      %s322 = smul.addr %s321, 8
      %s323 = scalar_lea.vmem %s9, %s322
      %s324 = smul.u32 4, %s20
      %p325 = scmp.lt.s32.totalorder %s324, 7
      %s326 = scalar_select %p325, %s324, 7
      %s327 = smul.addr %s326, 8
      %s328 = scalar_lea.vmem %s0, %s327
      %s329 = smul.u32 4, %s20
      %s330 = smul.u32 4, %s20
      %p331 = scmp.lt.s32.totalorder %s330, 7
      %s332 = scalar_select %p331, %s330, 7
      %s333 = smul.addr %s332, 8
      %s334 = scalar_lea.vmem %s9, %s333
      %s335 = smul.u32 4, %s20
      %v336 = vld [vmem:[%s1] sm:$0xff]
      %v337 = vld [vmem:[%s1 + $0x8] sm:$0xff]
      %v338 = vld [vmem:[%s1 + $0x10] sm:$0xff]
      %v339 = vld [vmem:[%s1 + $0x18] sm:$0xff]
      %v340 = vld [vmem:[%s1 + $0x20] sm:$0xff]
      %v341 = vld [vmem:[%s1 + $0x28] sm:$0xff]
      %v342 = vld [vmem:[%s1 + $0x30] sm:$0xff]
      %v343 = vld [vmem:[%s1 + $0x38] sm:$0xff]
      %v344 = vld [vmem:[%s1 + $0x40] sm:$0xff]
      %v345 = vld [vmem:[%s1 + $0x48] sm:$0xff]
      %v346 = vld [vmem:[%s1 + $0x50] sm:$0xff]
      %v347 = vld [vmem:[%s1 + $0x58] sm:$0xff]
      %v348 = vld [vmem:[%s1 + $0x60] sm:$0xff]
      %v349 = vld [vmem:[%s1 + $0x68] sm:$0xff]
      %v350 = vld [vmem:[%s1 + $0x70] sm:$0xff]
      %v351 = vld [vmem:[%s1 + $0x78] sm:$0xff]
      %v352 = vld [vmem:[%s328] sm:$0xff]
      %v353 = vld [vmem:[%s328 + $0x8] sm:$0xff]
      %v354 = vld [vmem:[%s328 + $0x10] sm:$0xff]
      %v355 = vld [vmem:[%s328 + $0x18] sm:$0xff]
      %v356 = vld [vmem:[%s2] sm:$0x1]
      %v358 = vlaneseq
      %v359 = vshrl.u32 %v358, 7
      %v360 = vsub.s32 0, %v359
      %v361 = vrot.slane %v356, %v360
      %363 = vmatprep.subr.mxu0 0.0
      %364 = vmatpush1.msra.mxu0 %v336
      %365 = vmatprep.subr.mxu0 0.0
      %366 = vmatpush1.msra.mxu0 %v337
      %367 = vmatprep.subr.mxu0 0.0
      %368 = vmatpush1.msra.mxu0 %v338
      %369 = vmatprep.subr.mxu0 0.0
      %370 = vmatpush1.msra.mxu0 %v339
      %371 = vmatprep.subr.mxu0 0.0
      %372 = vmatpush1.msra.mxu0 %v340
      %373 = vmatprep.subr.mxu0 0.0
      %374 = vmatpush1.msra.mxu0 %v341
      %375 = vmatprep.subr.mxu0 0.0
      %376 = vmatpush1.msra.mxu0 %v342
      %377 = vmatprep.subr.mxu0 0.0
      %378 = vmatpush1.msra.mxu0 %v343
      %379 = vmatprep.subr.mxu0 0.0
      %380 = vmatpush1.msra.mxu0 %v344
      %381 = vmatprep.subr.mxu0 0.0
      %382 = vmatpush1.msra.mxu0 %v345
      %383 = vmatprep.subr.mxu0 0.0
      %384 = vmatpush1.msra.mxu0 %v346
      %385 = vmatprep.subr.mxu0 0.0
      %386 = vmatpush1.msra.mxu0 %v347
      %387 = vmatprep.subr.mxu0 0.0
      %388 = vmatpush1.msra.mxu0 %v348
      %389 = vmatprep.subr.mxu0 0.0
      %390 = vmatpush1.msra.mxu0 %v349
      %391 = vmatprep.subr.mxu0 0.0
      %392 = vmatpush1.msra.mxu0 %v350
      %393 = vmatprep.subr.mxu0 0.0
      %394 = vmatpush1.msra.mxu0 %v351
      %395 = vmatprep.subr.mxu0 0.0
      %396 = vmatpush1.msra.mxu0 0.0
      %397 = vmatprep.subr.mxu0 0.0
      %398 = vmatpush1.msra.mxu0 0.0
      %399 = vmatprep.subr.mxu0 0.0
      %400 = vmatpush1.msra.mxu0 0.0
      %401 = vmatprep.subr.mxu0 0.0
      %402 = vmatpush1.msra.mxu0 0.0
      %403 = vmatprep.subr.mxu0 0.0
      %404 = vmatpush1.msra.mxu0 0.0
      %405 = vmatprep.subr.mxu0 0.0
      %406 = vmatpush1.msra.mxu0 0.0
      %407 = vmatprep.subr.mxu0 0.0
      %408 = vmatpush1.msra.mxu0 0.0
      %409 = vmatprep.subr.mxu0 0.0
      %410 = vmatpush1.msra.mxu0 0.0
      %411 = vmatprep.subr.mxu0 0.0
      %412 = vmatpush1.msra.mxu0 0.0
      %413 = vmatprep.subr.mxu0 0.0
      %414 = vmatpush1.msra.mxu0 0.0
      %415 = vmatprep.subr.mxu0 0.0
      %416 = vmatpush1.msra.mxu0 0.0
      %417 = vmatprep.subr.mxu0 0.0
      %418 = vmatpush1.msra.mxu0 0.0
      %419 = vmatprep.subr.mxu0 0.0
      %420 = vmatpush1.msra.mxu0 0.0
      %421 = vmatprep.subr.mxu0 0.0
      %422 = vmatpush1.msra.mxu0 0.0
      %423 = vmatprep.subr.mxu0 0.0
      %424 = vmatpush1.msra.mxu0 0.0
      %425 = vmatprep.subr.mxu0 0.0
      %426 = vmatpush1.msra.mxu0 0.0
      %427 = vmatprep.mubr.f32.mxu0 0.0
      %428 = vmatmul.mubr.f32.gmra.mrb[0].mxu0 %v352
      %v429 = vpop.f32.mrb[0].mxu0
      %v430 = vadd.f32 %v361, %v429
      %v431 = vpop.f32.mrb[0].mxu0
      %432 = vmatprep.mubr.f32.mxu0 0.0
      %433 = vmatmul.mubr.f32.gmra.mrb[0].mxu0 %v353
      %v434 = vpop.f32.mrb[0].mxu0
      %v435 = vadd.f32 %v361, %v434
      %v436 = vpop.f32.mrb[0].mxu0
      %437 = vmatprep.mubr.f32.mxu0 0.0
      %438 = vmatmul.mubr.f32.gmra.mrb[0].mxu0 %v354
      %v439 = vpop.f32.mrb[0].mxu0
      %v440 = vadd.f32 %v361, %v439
      %v441 = vpop.f32.mrb[0].mxu0
      %442 = vmatprep.mubr.f32.mxu0 0.0
      %443 = vmatmul.mubr.f32.gmra.mrb[0].mxu0 %v355
      %v444 = vpop.f32.mrb[0].mxu0
      %v445 = vadd.f32 %v361, %v444
      %v446 = vpop.f32.mrb[0].mxu0
      %447 = vdwg.mxu0
      %v448 = vtanh.pop %v430
      %v449 = vtanh.pop %v435
      %v450 = vtanh.pop %v440
      %v451 = vtanh.pop %v445
      %v452 = vld [vmem:[%s3] sm:$0xff]
      %v453 = vld [vmem:[%s3 + $0x8] sm:$0xff]
      %v454 = vld [vmem:[%s3 + $0x10] sm:$0xff]
      %v455 = vld [vmem:[%s3 + $0x18] sm:$0xff]
      %v456 = vld [vmem:[%s3 + $0x20] sm:$0xff]
      %v457 = vld [vmem:[%s3 + $0x28] sm:$0xff]
      %v458 = vld [vmem:[%s3 + $0x30] sm:$0xff]
      %v459 = vld [vmem:[%s3 + $0x38] sm:$0xff]
      %v460 = vld [vmem:[%s3 + $0x40] sm:$0xff]
      %v461 = vld [vmem:[%s3 + $0x48] sm:$0xff]
      %v462 = vld [vmem:[%s3 + $0x50] sm:$0xff]
      %v463 = vld [vmem:[%s3 + $0x58] sm:$0xff]
      %v464 = vld [vmem:[%s3 + $0x60] sm:$0xff]
      %v465 = vld [vmem:[%s3 + $0x68] sm:$0xff]
      %v466 = vld [vmem:[%s3 + $0x70] sm:$0xff]
      %v467 = vld [vmem:[%s3 + $0x78] sm:$0xff]
      %v468 = vld [vmem:[%s4] sm:$0x1]
      %v470 = vlaneseq
      %v471 = vshrl.u32 %v470, 7
      %v472 = vsub.s32 0, %v471
      %v473 = vrot.slane %v468, %v472
      %475 = vmatprep.subr.mxu0 0.0
      %476 = vmatpush1.msra.mxu0 %v452
      %477 = vmatprep.subr.mxu0 0.0
      %478 = vmatpush1.msra.mxu0 %v453
      %479 = vmatprep.subr.mxu0 0.0
      %480 = vmatpush1.msra.mxu0 %v454
      %481 = vmatprep.subr.mxu0 0.0
      %482 = vmatpush1.msra.mxu0 %v455
      %483 = vmatprep.subr.mxu0 0.0
      %484 = vmatpush1.msra.mxu0 %v456
      %485 = vmatprep.subr.mxu0 0.0
      %486 = vmatpush1.msra.mxu0 %v457
      %487 = vmatprep.subr.mxu0 0.0
      %488 = vmatpush1.msra.mxu0 %v458
      %489 = vmatprep.subr.mxu0 0.0
      %490 = vmatpush1.msra.mxu0 %v459
      %491 = vmatprep.subr.mxu0 0.0
      %492 = vmatpush1.msra.mxu0 %v460
      %493 = vmatprep.subr.mxu0 0.0
      %494 = vmatpush1.msra.mxu0 %v461
      %495 = vmatprep.subr.mxu0 0.0
      %496 = vmatpush1.msra.mxu0 %v462
      %497 = vmatprep.subr.mxu0 0.0
      %498 = vmatpush1.msra.mxu0 %v463
      %499 = vmatprep.subr.mxu0 0.0
      %500 = vmatpush1.msra.mxu0 %v464
      %501 = vmatprep.subr.mxu0 0.0
      %502 = vmatpush1.msra.mxu0 %v465
      %503 = vmatprep.subr.mxu0 0.0
      %504 = vmatpush1.msra.mxu0 %v466
      %505 = vmatprep.subr.mxu0 0.0
      %506 = vmatpush1.msra.mxu0 %v467
      %507 = vmatprep.subr.mxu0 0.0
      %508 = vmatpush1.msra.mxu0 0.0
      %509 = vmatprep.subr.mxu0 0.0
      %510 = vmatpush1.msra.mxu0 0.0
      %511 = vmatprep.subr.mxu0 0.0
      %512 = vmatpush1.msra.mxu0 0.0
      %513 = vmatprep.subr.mxu0 0.0
      %514 = vmatpush1.msra.mxu0 0.0
      %515 = vmatprep.subr.mxu0 0.0
      %516 = vmatpush1.msra.mxu0 0.0
      %517 = vmatprep.subr.mxu0 0.0
      %518 = vmatpush1.msra.mxu0 0.0
      %519 = vmatprep.subr.mxu0 0.0
      %520 = vmatpush1.msra.mxu0 0.0
      %521 = vmatprep.subr.mxu0 0.0
      %522 = vmatpush1.msra.mxu0 0.0
      %523 = vmatprep.subr.mxu0 0.0
      %524 = vmatpush1.msra.mxu0 0.0
      %525 = vmatprep.subr.mxu0 0.0
      %526 = vmatpush1.msra.mxu0 0.0
      %527 = vmatprep.subr.mxu0 0.0
      %528 = vmatpush1.msra.mxu0 0.0
      %529 = vmatprep.subr.mxu0 0.0
      %530 = vmatpush1.msra.mxu0 0.0
      %531 = vmatprep.subr.mxu0 0.0
      %532 = vmatpush1.msra.mxu0 0.0
      %533 = vmatprep.subr.mxu0 0.0
      %534 = vmatpush1.msra.mxu0 0.0
      %535 = vmatprep.subr.mxu0 0.0
      %536 = vmatpush1.msra.mxu0 0.0
      %537 = vmatprep.subr.mxu0 0.0
      %538 = vmatpush1.msra.mxu0 0.0
      %539 = vmatprep.mubr.f32.mxu0 0.0
      %540 = vmatmul.mubr.f32.gmra.mrb[0].mxu0 %v448
      %v541 = vpop.f32.mrb[0].mxu0
      %v542 = vadd.f32 %v473, %v541
      %v543 = vpop.f32.mrb[0].mxu0
      %544 = vmatprep.mubr.f32.mxu0 0.0
      %545 = vmatmul.mubr.f32.gmra.mrb[0].mxu0 %v449
      %v546 = vpop.f32.mrb[0].mxu0
      %v547 = vadd.f32 %v473, %v546
      %v548 = vpop.f32.mrb[0].mxu0
      %549 = vmatprep.mubr.f32.mxu0 0.0
      %550 = vmatmul.mubr.f32.gmra.mrb[0].mxu0 %v450
      %v551 = vpop.f32.mrb[0].mxu0
      %v552 = vadd.f32 %v473, %v551
      %v553 = vpop.f32.mrb[0].mxu0
      %554 = vmatprep.mubr.f32.mxu0 0.0
      %555 = vmatmul.mubr.f32.gmra.mrb[0].mxu0 %v451
      %v556 = vpop.f32.mrb[0].mxu0
      %v557 = vadd.f32 %v473, %v556
      %v558 = vpop.f32.mrb[0].mxu0
      %559 = vdwg.mxu0
      %v560 = vmax.f32 %v542, 0.0
      %v561 = vmax.f32 %v547, 0.0
      %v562 = vmax.f32 %v552, 0.0
      %v563 = vmax.f32 %v557, 0.0
      %v564 = vld [vmem:[%s5] sm:$0xff]
      %v565 = vld [vmem:[%s5 + $0x8] sm:$0xff]
      %v566 = vld [vmem:[%s5 + $0x10] sm:$0xff]
      %v567 = vld [vmem:[%s5 + $0x18] sm:$0xff]
      %v568 = vld [vmem:[%s5 + $0x20] sm:$0xff]
      %v569 = vld [vmem:[%s5 + $0x28] sm:$0xff]
      %v570 = vld [vmem:[%s5 + $0x30] sm:$0xff]
      %v571 = vld [vmem:[%s5 + $0x38] sm:$0xff]
      %v572 = vld [vmem:[%s5 + $0x40] sm:$0xff]
      %v573 = vld [vmem:[%s5 + $0x48] sm:$0xff]
      %v574 = vld [vmem:[%s5 + $0x50] sm:$0xff]
      %v575 = vld [vmem:[%s5 + $0x58] sm:$0xff]
      %v576 = vld [vmem:[%s5 + $0x60] sm:$0xff]
      %v577 = vld [vmem:[%s5 + $0x68] sm:$0xff]
      %v578 = vld [vmem:[%s5 + $0x70] sm:$0xff]
      %v579 = vld [vmem:[%s5 + $0x78] sm:$0xff]
      %v580 = vld [vmem:[%s6] sm:$0x1]
      %v582 = vlaneseq
      %v583 = vshrl.u32 %v582, 7
      %v584 = vsub.s32 0, %v583
      %v585 = vrot.slane %v580, %v584
      %587 = vmatprep.subr.mxu0 0.0
      %588 = vmatpush1.msra.mxu0 %v564
      %589 = vmatprep.subr.mxu0 0.0
      %590 = vmatpush1.msra.mxu0 %v565
      %591 = vmatprep.subr.mxu0 0.0
      %592 = vmatpush1.msra.mxu0 %v566
      %593 = vmatprep.subr.mxu0 0.0
      %594 = vmatpush1.msra.mxu0 %v567
      %595 = vmatprep.subr.mxu0 0.0
      %596 = vmatpush1.msra.mxu0 %v568
      %597 = vmatprep.subr.mxu0 0.0
      %598 = vmatpush1.msra.mxu0 %v569
      %599 = vmatprep.subr.mxu0 0.0
      %600 = vmatpush1.msra.mxu0 %v570
      %601 = vmatprep.subr.mxu0 0.0
      %602 = vmatpush1.msra.mxu0 %v571
      %603 = vmatprep.subr.mxu0 0.0
      %604 = vmatpush1.msra.mxu0 %v572
      %605 = vmatprep.subr.mxu0 0.0
      %606 = vmatpush1.msra.mxu0 %v573
      %607 = vmatprep.subr.mxu0 0.0
      %608 = vmatpush1.msra.mxu0 %v574
      %609 = vmatprep.subr.mxu0 0.0
      %610 = vmatpush1.msra.mxu0 %v575
      %611 = vmatprep.subr.mxu0 0.0
      %612 = vmatpush1.msra.mxu0 %v576
      %613 = vmatprep.subr.mxu0 0.0
      %614 = vmatpush1.msra.mxu0 %v577
      %615 = vmatprep.subr.mxu0 0.0
      %616 = vmatpush1.msra.mxu0 %v578
      %617 = vmatprep.subr.mxu0 0.0
      %618 = vmatpush1.msra.mxu0 %v579
      %619 = vmatprep.subr.mxu0 0.0
      %620 = vmatpush1.msra.mxu0 0.0
      %621 = vmatprep.subr.mxu0 0.0
      %622 = vmatpush1.msra.mxu0 0.0
      %623 = vmatprep.subr.mxu0 0.0
      %624 = vmatpush1.msra.mxu0 0.0
      %625 = vmatprep.subr.mxu0 0.0
      %626 = vmatpush1.msra.mxu0 0.0
      %627 = vmatprep.subr.mxu0 0.0
      %628 = vmatpush1.msra.mxu0 0.0
      %629 = vmatprep.subr.mxu0 0.0
      %630 = vmatpush1.msra.mxu0 0.0
      %631 = vmatprep.subr.mxu0 0.0
      %632 = vmatpush1.msra.mxu0 0.0
      %633 = vmatprep.subr.mxu0 0.0
      %634 = vmatpush1.msra.mxu0 0.0
      %635 = vmatprep.subr.mxu0 0.0
      %636 = vmatpush1.msra.mxu0 0.0
      %637 = vmatprep.subr.mxu0 0.0
      %638 = vmatpush1.msra.mxu0 0.0
      %639 = vmatprep.subr.mxu0 0.0
      %640 = vmatpush1.msra.mxu0 0.0
      %641 = vmatprep.subr.mxu0 0.0
      %642 = vmatpush1.msra.mxu0 0.0
      %643 = vmatprep.subr.mxu0 0.0
      %644 = vmatpush1.msra.mxu0 0.0
      %645 = vmatprep.subr.mxu0 0.0
      %646 = vmatpush1.msra.mxu0 0.0
      %647 = vmatprep.subr.mxu0 0.0
      %648 = vmatpush1.msra.mxu0 0.0
      %649 = vmatprep.subr.mxu0 0.0
      %650 = vmatpush1.msra.mxu0 0.0
      %651 = vmatprep.mubr.f32.mxu0 0.0
      %652 = vmatmul.mubr.f32.gmra.mrb[0].mxu0 %v560
      %v653 = vpop.f32.mrb[0].mxu0
      %v654 = vadd.f32 %v585, %v653
      %v655 = vpop.f32.mrb[0].mxu0
      %656 = vmatprep.mubr.f32.mxu0 0.0
      %657 = vmatmul.mubr.f32.gmra.mrb[0].mxu0 %v561
      %v658 = vpop.f32.mrb[0].mxu0
      %v659 = vadd.f32 %v585, %v658
      %v660 = vpop.f32.mrb[0].mxu0
      %661 = vmatprep.mubr.f32.mxu0 0.0
      %662 = vmatmul.mubr.f32.gmra.mrb[0].mxu0 %v562
      %v663 = vpop.f32.mrb[0].mxu0
      %v664 = vadd.f32 %v585, %v663
      %v665 = vpop.f32.mrb[0].mxu0
      %666 = vmatprep.mubr.f32.mxu0 0.0
      %667 = vmatmul.mubr.f32.gmra.mrb[0].mxu0 %v563
      %v668 = vpop.f32.mrb[0].mxu0
      %v669 = vadd.f32 %v585, %v668
      %v670 = vpop.f32.mrb[0].mxu0
      %671 = vdwg.mxu0
      %v672 = vmax.f32 %v654, 0.0
      %v673 = vmax.f32 %v659, 0.0
      %v674 = vmax.f32 %v664, 0.0
      %v675 = vmax.f32 %v669, 0.0
      %v676 = vld [vmem:[%s7] sm:$0xff]
      %v677 = vld [vmem:[%s7 + $0x8] sm:$0xff]
      %v678 = vld [vmem:[%s7 + $0x10] sm:$0xff]
      %v679 = vld [vmem:[%s7 + $0x18] sm:$0xff]
      %v680 = vld [vmem:[%s7 + $0x20] sm:$0xff]
      %v681 = vld [vmem:[%s7 + $0x28] sm:$0xff]
      %v682 = vld [vmem:[%s7 + $0x30] sm:$0xff]
      %v683 = vld [vmem:[%s7 + $0x38] sm:$0xff]
      %v684 = vld [vmem:[%s7 + $0x40] sm:$0xff]
      %v685 = vld [vmem:[%s7 + $0x48] sm:$0xff]
      %v686 = vld [vmem:[%s7 + $0x50] sm:$0xff]
      %v687 = vld [vmem:[%s7 + $0x58] sm:$0xff]
      %v688 = vld [vmem:[%s7 + $0x60] sm:$0xff]
      %v689 = vld [vmem:[%s7 + $0x68] sm:$0xff]
      %v690 = vld [vmem:[%s7 + $0x70] sm:$0xff]
      %v691 = vld [vmem:[%s7 + $0x78] sm:$0xff]
      %v692 = vld [vmem:[%s8] sm:$0x1]
      %v694 = vlaneseq
      %v695 = vshrl.u32 %v694, 7
      %v696 = vsub.s32 0, %v695
      %v697 = vrot.slane %v692, %v696
      %699 = vmatprep.subr.mxu0 0.0
      %700 = vmatpush1.msra.mxu0 %v676
      %701 = vmatprep.subr.mxu0 0.0
      %702 = vmatpush1.msra.mxu0 %v677
      %703 = vmatprep.subr.mxu0 0.0
      %704 = vmatpush1.msra.mxu0 %v678
      %705 = vmatprep.subr.mxu0 0.0
      %706 = vmatpush1.msra.mxu0 %v679
      %707 = vmatprep.subr.mxu0 0.0
      %708 = vmatpush1.msra.mxu0 %v680
      %709 = vmatprep.subr.mxu0 0.0
      %710 = vmatpush1.msra.mxu0 %v681
      %711 = vmatprep.subr.mxu0 0.0
      %712 = vmatpush1.msra.mxu0 %v682
      %713 = vmatprep.subr.mxu0 0.0
      %714 = vmatpush1.msra.mxu0 %v683
      %715 = vmatprep.subr.mxu0 0.0
      %716 = vmatpush1.msra.mxu0 %v684
      %717 = vmatprep.subr.mxu0 0.0
      %718 = vmatpush1.msra.mxu0 %v685
      %719 = vmatprep.subr.mxu0 0.0
      %720 = vmatpush1.msra.mxu0 %v686
      %721 = vmatprep.subr.mxu0 0.0
      %722 = vmatpush1.msra.mxu0 %v687
      %723 = vmatprep.subr.mxu0 0.0
      %724 = vmatpush1.msra.mxu0 %v688
      %725 = vmatprep.subr.mxu0 0.0
      %726 = vmatpush1.msra.mxu0 %v689
      %727 = vmatprep.subr.mxu0 0.0
      %728 = vmatpush1.msra.mxu0 %v690
      %729 = vmatprep.subr.mxu0 0.0
      %730 = vmatpush1.msra.mxu0 %v691
      %731 = vmatprep.subr.mxu0 0.0
      %732 = vmatpush1.msra.mxu0 0.0
      %733 = vmatprep.subr.mxu0 0.0
      %734 = vmatpush1.msra.mxu0 0.0
      %735 = vmatprep.subr.mxu0 0.0
      %736 = vmatpush1.msra.mxu0 0.0
      %737 = vmatprep.subr.mxu0 0.0
      %738 = vmatpush1.msra.mxu0 0.0
      %739 = vmatprep.subr.mxu0 0.0
      %740 = vmatpush1.msra.mxu0 0.0
      %741 = vmatprep.subr.mxu0 0.0
      %742 = vmatpush1.msra.mxu0 0.0
      %743 = vmatprep.subr.mxu0 0.0
      %744 = vmatpush1.msra.mxu0 0.0
      %745 = vmatprep.subr.mxu0 0.0
      %746 = vmatpush1.msra.mxu0 0.0
      %747 = vmatprep.subr.mxu0 0.0
      %748 = vmatpush1.msra.mxu0 0.0
      %749 = vmatprep.subr.mxu0 0.0
      %750 = vmatpush1.msra.mxu0 0.0
      %751 = vmatprep.subr.mxu0 0.0
      %752 = vmatpush1.msra.mxu0 0.0
      %753 = vmatprep.subr.mxu0 0.0
      %754 = vmatpush1.msra.mxu0 0.0
      %755 = vmatprep.subr.mxu0 0.0
      %756 = vmatpush1.msra.mxu0 0.0
      %757 = vmatprep.subr.mxu0 0.0
      %758 = vmatpush1.msra.mxu0 0.0
      %759 = vmatprep.subr.mxu0 0.0
      %760 = vmatpush1.msra.mxu0 0.0
      %761 = vmatprep.subr.mxu0 0.0
      %762 = vmatpush1.msra.mxu0 0.0
      %763 = vmatprep.mubr.f32.mxu0 0.0
      %764 = vmatmul.mubr.f32.gmra.mrb[0].mxu0 %v672
      %v765 = vpop.f32.mrb[0].mxu0
      %v766 = vadd.f32 %v697, %v765
      %v767 = vpop.f32.mrb[0].mxu0
      %768 = vmatprep.mubr.f32.mxu0 0.0
      %769 = vmatmul.mubr.f32.gmra.mrb[0].mxu0 %v673
      %v770 = vpop.f32.mrb[0].mxu0
      %v771 = vadd.f32 %v697, %v770
      %v772 = vpop.f32.mrb[0].mxu0
      %773 = vmatprep.mubr.f32.mxu0 0.0
      %774 = vmatmul.mubr.f32.gmra.mrb[0].mxu0 %v674
      %v775 = vpop.f32.mrb[0].mxu0
      %v776 = vadd.f32 %v697, %v775
      %v777 = vpop.f32.mrb[0].mxu0
      %778 = vmatprep.mubr.f32.mxu0 0.0
      %779 = vmatmul.mubr.f32.gmra.mrb[0].mxu0 %v675
      %v780 = vpop.f32.mrb[0].mxu0
      %v781 = vadd.f32 %v697, %v780
      %v782 = vpop.f32.mrb[0].mxu0
      %783 = vdwg.mxu0
      %784 = vst [vmem:[%s334] sm:$0xff] %v766
      %785 = vst [vmem:[%s334 + $0x8] sm:$0xff] %v771
      %786 = vst [vmem:[%s334 + $0x10] sm:$0xff] %v776
      %787 = vst [vmem:[%s334 + $0x18] sm:$0xff] %v781
      %s788 = smul.u32 4, %s20
      %p789 = scmp.lt.s32.totalorder %s788, 7
      %s790 = scalar_select %p789, %s788, 7
      %s791 = smul.addr %s790, 8
      %s792 = scalar_lea.vmem %s9, %s791
      // Predicated region
      $region57: #{neural_network_forward.1} parent=55 // pred_check
        %p793 = pneg %p232
      $region58: #{neural_network_forward.1} parent=55 // pred_check_branch
        %795 = sbr.rel (%p793) target = $region60
      $region59: #{neural_network_forward.1} parent=55 // pred_region
        %s796 = smul.u32 4, %s20
      $region60: #{neural_network_forward.1} parent=55 // pred_fallthru
        _
    $region56: #{neural_network_forward.1} parent=5 // pred_fallthru
      _
    %p797 = scmp.le.s32.totalorder 2, %s15
    // Predicated region
    $region61: #{neural_network_forward.1} parent=5 // pred_check
      %p798 = pneg %p797
    $region62: #{neural_network_forward.1} parent=5 // pred_check_branch
      %800 = sbr.rel (%p798) target = $region64
    $region63: #{neural_network_forward.1} parent=5 // pred_region
      %s801 = ssub.s32 %s15, 2
      // Predicated region
      $region65: #{neural_network_forward.1} parent=63 // pred_check
        %p802 = pneg %p238
      $region66: #{neural_network_forward.1} parent=63 // pred_check_branch
        %804 = sbr.rel (%p802) target = $region68
      $region67: #{neural_network_forward.1} parent=63 // pred_region
        %s805 = smul.u32 4, %s21
        %p806 = scmp.lt.s32.totalorder %s805, 7
        %s807 = scalar_select %p806, %s805, 7
        %s808 = smul.addr %s807, 8
        %s809 = scalar_lea.vmem %s9, %s808
      $region68: #{neural_network_forward.1} parent=63 // pred_fallthru
        _
    $region64: #{neural_network_forward.1} parent=5 // pred_fallthru
      _
  $region6: #{neural_network_forward.1} parent=0 // loop_footer
    %s19 = sadd.s32 1, %s15
  $region7: #{neural_network_forward.1} parent=0 // loop_footer_branch
    %14 = sbr.rel target = $region3
  $region8: #{neural_network_forward.1} parent=0 // loop_exit
    _

</llo_original>
